<compile_context>
chip_gen: v7x
topology: tpu7x:2x2x1
jax: 0.10.0
libtpu: 0.0.40
codegen_flags: <defaults>
</compile_context>

<pallas_src>
import jax
import jax.numpy as jnp
from jax.experimental import pallas as pl
from jax.experimental.pallas import tpu as pltpu


def _identity_copy_kernel(x_ref, o_ref):
    # Pure pass-through of the current VMEM tile.
    o_ref[...] = x_ref[...]


def _identity_copy_pallas(x):
    """Materialized identity copy through a single Pallas pass (read+write only)."""
    n = x.size
    if n == 0:
        return x

    itemsize = x.dtype.itemsize
    # Native sublane multiple per dtype width: f32 -> 8, bf16 -> 16, int8/fp8 -> 32.
    sub = {4: 8, 2: 16, 1: 32}.get(itemsize, 8)
    lanes = 128

    if n % lanes == 0 and (n // lanes) % sub == 0:
        rows = n // lanes
        # Widen the last dim (up to 4096 lanes) while the sublane constraint
        # still holds: wide, unmasked lane-dense stores + fewer grid steps.
        while lanes < 4096 and rows % (2 * sub) == 0:
            rows //= 2
            lanes *= 2
        slab = x.reshape(rows, lanes)  # contiguous row-major reshape: bitcast, no copy

        # ~2 MiB tiles: double-buffered in+out = ~8 MiB of VMEM, safe on
        # v5e/v6e (128 MiB) and v7x (64 MiB physical / 32 MiB scoped).
        target_rows = max(sub, (2 * 1024 * 1024) // (lanes * itemsize))
        tile_rows = min(rows, target_rows)
        tile_rows -= tile_rows % sub
        grid = (pl.cdiv(rows, tile_rows),)

        out = pl.pallas_call(
            _identity_copy_kernel,
            out_shape=jax.ShapeDtypeStruct(slab.shape, slab.dtype),
            grid=grid,
            in_specs=[pl.BlockSpec((tile_rows, lanes), lambda i: (i, 0))],
            out_specs=pl.BlockSpec((tile_rows, lanes), lambda i: (i, 0)),
            input_output_aliases={0: 0},
            compiler_params=pltpu.CompilerParams(
                dimension_semantics=("parallel",),
            ),
        )(slab)
        return out.reshape(x.shape)

    # Awkward sizes: single full-extent block (exempt from the (8,128) rule).
    return pl.pallas_call(
        _identity_copy_kernel,
        out_shape=jax.ShapeDtypeStruct(x.shape, x.dtype),
        grid=(1,),
        in_specs=[pl.BlockSpec(x.shape, lambda i: (0,) * x.ndim)],
        out_specs=pl.BlockSpec(x.shape, lambda i: (0,) * x.ndim),
        input_output_aliases={0: 0},
    )(x)


# Donate the argument so input_output_aliases can truly reuse the HBM buffer.
identity_copy = jax.jit(_identity_copy_pallas, donate_argnums=(0,))


class PlaceholderPallas:
    """JAX port of the PyTorch `Placeholder` module.

    The forward/reverse paths are pure pass-throughs (zero HBM traffic),
    matching the PyTorch semantics exactly. Use `identity_copy` only if a
    materialized copy is explicitly required.
    """

    def __init__(self, output=1):
        if output == 1:
            self.pointer = "forward1"
            self.rpointer = "reverse1"
        else:
            self.pointer = "forward2"
            self.rpointer = "reverse2"

    def forward(self, *args, **kwargs):
        return getattr(self, self.pointer)(*args, **kwargs)

    def reverse(self, *args, **kwargs):
        return getattr(self, self.rpointer)(*args, **kwargs)

    # output == 1 variants (identity, no kernel, no copy)
    def forward1(self, x):
        return x

    def reverse1(self, x):
        return x

    # output != 1 variants
    def forward2(self, x):
        return (x, None)

    def reverse2(self, x, other):
        return x


if __name__ == "__main__":
    key = jax.random.PRNGKey(0)
    shape = (2, 4, 16, 16)  # NCHW
    x = jax.random.normal(key, shape, dtype=jnp.float32)

    # output=1 path: forward/reverse are identity (zero-cost pass-through).
    mod1 = PlaceholderPallas(output=1)
    y1 = mod1.forward(x)
    jax.block_until_ready(y1)
    assert y1.shape == x.shape and y1.dtype == x.dtype
    assert jnp.array_equal(y1, x)
    r1 = mod1.reverse(x)
    jax.block_until_ready(r1)
    assert jnp.array_equal(r1, x)

    # output=2 path: forward returns (x, None), reverse(x, other) -> x.
    mod2 = PlaceholderPallas(output=2)
    y2, aux = mod2.forward(x)
    jax.block_until_ready(y2)
    assert aux is None
    assert jnp.array_equal(y2, x)
    r2 = mod2.reverse(x, None)
    jax.block_until_ready(r2)
    assert jnp.array_equal(r2, x)

    # Optional materialized-copy path through the Pallas kernel.
    # Use a separately-materialized twin (same key -> identical values) so the
    # donated buffer is not `x` itself and we can still compare against x.
    x_twin = jax.random.normal(key, shape, dtype=jnp.float32)
    y_copy = identity_copy(x_twin)
    jax.block_until_ready(y_copy)
    assert y_copy.shape == x.shape and y_copy.dtype == x.dtype
    assert jnp.array_equal(y_copy, x)

    print("KERNEL_OK")
</pallas_src>

<mosaic_0001>
module attributes {stable_mosaic.version = 11 : i64} {
  func.func @_identity_copy_kernel(%arg0: i32, %arg1: memref<8x256xf32, #tpu.memory_space<vmem>>, %arg2: memref<8x256xf32, #tpu.memory_space<vmem>>) attributes {dimension_semantics = [#tpu.dimension_semantics<parallel>], iteration_bounds = array<i64: 1>, scalar_prefetch = 0 : i64, scratch_operands = 0 : i64, tpu.core_type = #tpu.core_type<tc>, window_params = [{transform_indices = @transform_0, window_bounds = array<i64: 8, 256>}, {transform_indices = @transform_1, window_bounds = array<i64: 8, 256>}]} {
    %c0 = arith.constant 0 : index
    %c0_0 = arith.constant 0 : index
    %0 = vector.load %arg1[%c0, %c0_0] : memref<8x256xf32, #tpu.memory_space<vmem>>, vector<8x256xf32>
    %c0_1 = arith.constant 0 : index
    %c0_2 = arith.constant 0 : index
    %1 = vector.load %arg2[%c0_1, %c0_2] : memref<8x256xf32, #tpu.memory_space<vmem>>, vector<8x256xf32>
    tpu.vector_store %arg2[%c0_1, %c0_2], %0 {strides = array<i32>} : memref<8x256xf32, #tpu.memory_space<vmem>>, vector<8x256xf32>,
    return
  }
  func.func @transform_0(%arg0: i32) -> (i32, i32) {
    %c0_i32 = arith.constant 0 : i32
    %c0_i32_0 = arith.constant 0 : i32
    return %arg0, %c0_i32 : i32, i32
  }
  func.func @transform_1(%arg0: i32) -> (i32, i32) {
    %c0_i32 = arith.constant 0 : i32
    %c0_i32_0 = arith.constant 0 : i32
    return %arg0, %c0_i32 : i32, i32
  }
}

</mosaic_0001>

<llo_original>
// kernel: _identity_copy_pallas.1
$region0: #{_identity_copy_pallas.1}
  #allocation0 [shape = 'u32[]', space=smem, size = 0x4, offset = 0x4, fixed_abs, tag = 'smem constant byte address 0x4 - core index']
  #allocation1 [shape = 'u32[144,128]{1,0:T(1,128)}', space=vmem, size = 0x12000, scoped, tag = 'internal scratch']
  %s0 = inlined_call_operand.vmem [shape: f32[8,256], index: 0, kind: input, shape index: {}, may-alias: {0,1}]
  %s1 = inlined_call_operand.vmem [shape: f32[8,256], index: 1, kind: output, shape index: {}, may-alias: {0,1}]
  %s2 = sld [smem:[#allocation0]]
  $region14: #{_identity_copy_pallas.1} parent=0
    _
  %s4 = ssub.s32 1, %s2
  %s5 = scalar_select 0, %s4, %s2
  // Predicated region
  $region2: #{_identity_copy_pallas.1} parent=0 // pred_check
    _
  $region3: #{_identity_copy_pallas.1} parent=0 // pred_check_branch
    %7 = sbr.rel (0) target = $region5
  $region4: #{_identity_copy_pallas.1} parent=0 // pred_region
    _
  $region5: #{_identity_copy_pallas.1} parent=0 // pred_fallthru
    _
  %v8 = vld [vmem:[%s0] sm:$0xff]
  %v9 = vld [vmem:[%s0 + $0x8] sm:$0xff]
  %10 = vst [vmem:[%s1] sm:$0xff] %v8
  %11 = vst [vmem:[%s1 + $0x8] sm:$0xff] %v9
  // Predicated region
  $region6: #{_identity_copy_pallas.1} parent=0 // pred_check
    _
  $region7: #{_identity_copy_pallas.1} parent=0 // pred_check_branch
    %13 = sbr.rel (0) target = $region9
  $region8: #{_identity_copy_pallas.1} parent=0 // pred_region
    _
  $region9: #{_identity_copy_pallas.1} parent=0 // pred_fallthru
    _
  // Predicated region
  $region10: #{_identity_copy_pallas.1} parent=0 // pred_check
    _
  $region11: #{_identity_copy_pallas.1} parent=0 // pred_check_branch
    %15 = sbr.rel (0) target = $region13
  $region12: #{_identity_copy_pallas.1} parent=0 // pred_region
    _
  $region13: #{_identity_copy_pallas.1} parent=0 // pred_fallthru
    _

</llo_original>
